<compile_context>
chip_gen: v7x
topology: tpu7x:2x2x1
jax: 0.10.0
libtpu: 0.0.40
codegen_flags: <defaults>
</compile_context>

<pallas_src>
import jax
import jax.numpy as jnp
from jax.experimental import pallas as pl
from jax.experimental.pallas import tpu as pltpu


def _round_up(x, m):
    return ((x + m - 1) // m) * m


def _vmem_capacity_bytes():
    # Generation-aware VMEM query; fall back to the smallest (v7x = 64 MiB).
    try:
        return int(pltpu.get_tpu_info().vmem_capacity_bytes)
    except Exception:
        return 64 * 1024 * 1024


def _pick_tm(C, in_itemsize, tgt_itemsize, vmem_bytes):
    # 2 pipeline buffers per input, both inputs resident per grid step.
    # Keep the working set at ~50% of physical VMEM for headroom.
    budget = vmem_bytes // 2
    per_row = 2 * C * (in_itemsize + tgt_itemsize)
    tm = budget // max(per_row, 1)
    tm = (tm // 8) * 8
    return max(8, min(2048, tm))


def _softxent_kernel(x_ref, t_ref, o_ref):
    x = x_ref[...].astype(jnp.float32)            # (tm, C)
    t = t_ref[...].astype(jnp.float32)            # (tm, C)

    # numerically-stable log-softmax pieces along class (lane) axis
    m = jnp.max(x, axis=-1, keepdims=True)        # (tm, 1)
    shifted = x - m                               # (tm, C)
    lse = jnp.log(jnp.sum(jnp.exp(shifted), axis=-1, keepdims=True))  # (tm, 1)

    # -(t * (shifted - lse)).sum(classes) == lse * sum(t) - sum(t * shifted)
    t_sum = jnp.sum(t, axis=-1, keepdims=True)              # (tm, 1)
    ts_sum = jnp.sum(t * shifted, axis=-1, keepdims=True)   # (tm, 1)

    # per-row negative contribution; each tile owns its own output block
    o_ref[...] = lse * t_sum - ts_sum


def soft_xent(inputs, targets):
    """Scalar soft cross-entropy loss computed in a Pallas TPU kernel."""
    N, C = inputs.shape
    assert targets.shape == (N, C)

    vmem_bytes = _vmem_capacity_bytes()
    in_isz = jnp.dtype(inputs.dtype).itemsize
    tg_isz = jnp.dtype(targets.dtype).itemsize

    tm = _pick_tm(C, in_isz, tg_isz, vmem_bytes)
    tm = min(tm, _round_up(N, 8))          # never bigger than (padded) batch
    n_pad = _round_up(N, tm)

    if n_pad != N:
        pad = n_pad - N
        # Padded rows have target == 0 -> exactly zero loss contribution.
        inputs = jnp.pad(inputs, ((0, pad), (0, 0)))
        targets = jnp.pad(targets, ((0, pad), (0, 0)))

    num_tiles = n_pad // tm

    # TODO(synk): for vocab-scale C where a full (tm, C) row-block cannot fit
    # VMEM with a reasonable tm, add a class-axis grid dim with an online
    # logsumexp (flash-style running max/sum scratch).

    per_row = pl.pallas_call(
        _softxent_kernel,
        out_shape=jax.ShapeDtypeStruct((n_pad, 1), jnp.float32),
        grid_spec=pltpu.PrefetchScalarGridSpec(
            num_scalar_prefetch=0,
            grid=(num_tiles,),
            in_specs=[
                pl.BlockSpec((tm, C), lambda i: (i, 0)),
                pl.BlockSpec((tm, C), lambda i: (i, 0)),
            ],
            out_specs=pl.BlockSpec((tm, 1), lambda i: (i, 0)),
        ),
        compiler_params=pltpu.CompilerParams(
            # Per-tile outputs -> no cross-step accumulation -> batch axis can
            # be sharded across both TensorCores on v7x.
            dimension_semantics=("parallel",),
            vmem_limit_bytes=int(vmem_bytes * 0.75),
        ),
    )(inputs, targets)

    # Tiny final reduction over per-row partials (padded rows contribute 0).
    return jnp.sum(per_row)


if __name__ == "__main__":
    key = jax.random.PRNGKey(0)
    k1, k2 = jax.random.split(key)

    N, C = 16, 128
    logits = jax.random.normal(k1, (N, C), dtype=jnp.float32)
    # soft targets: a valid probability distribution per row
    targets = jax.nn.softmax(jax.random.normal(k2, (N, C), dtype=jnp.float32), axis=1)

    loss = soft_xent(logits, targets)
    loss = jax.block_until_ready(loss)

    # pure-JAX reference for sanity check
    ref = -jnp.sum(targets * jax.nn.log_softmax(logits, axis=1))
    assert jnp.allclose(loss, ref, rtol=1e-5, atol=1e-5), (loss, ref)

    # bf16 inputs (halved HBM traffic path) with looser tolerance
    loss_bf16 = soft_xent(logits.astype(jnp.bfloat16), targets.astype(jnp.bfloat16))
    loss_bf16 = jax.block_until_ready(loss_bf16)
    assert jnp.allclose(loss_bf16, ref, rtol=2e-2, atol=2e-2), (loss_bf16, ref)

    print("KERNEL_OK")
</pallas_src>

<mosaic_0001>
module attributes {stable_mosaic.version = 11 : i64} {
  func.func @_softxent_kernel(%arg0: i32, %arg1: memref<16x128xf32, #tpu.memory_space<vmem>>, %arg2: memref<16x128xf32, #tpu.memory_space<vmem>>, %arg3: memref<16x1xf32, #tpu.memory_space<vmem>>) attributes {dimension_semantics = [#tpu.dimension_semantics<parallel>], iteration_bounds = array<i64: 1>, scalar_prefetch = 0 : i64, scratch_operands = 0 : i64, tpu.core_type = #tpu.core_type<tc>, window_params = [{transform_indices = @transform_0, window_bounds = array<i64: 16, 128>}, {transform_indices = @transform_1, window_bounds = array<i64: 16, 128>}, {transform_indices = @transform_2, window_bounds = array<i64: 16, 1>}]} {
    %c0 = arith.constant 0 : index
    %c0_0 = arith.constant 0 : index
    %0 = vector.load %arg1[%c0, %c0_0] : memref<16x128xf32, #tpu.memory_space<vmem>>, vector<16x128xf32>
    %c0_1 = arith.constant 0 : index
    %c0_2 = arith.constant 0 : index
    %1 = vector.load %arg2[%c0_1, %c0_2] : memref<16x128xf32, #tpu.memory_space<vmem>>, vector<16x128xf32>
    %cst = arith.constant dense<0xFF800000> : vector<16xf32>
    %2 = vector.multi_reduction <maximumf>, %0, %cst [1] : vector<16x128xf32> to vector<16xf32>
    %3 = vector.shape_cast %2 : vector<16xf32> to vector<16x1xf32>
    %4 = vector.broadcast %3 : vector<16x1xf32> to vector<16x128xf32>
    %5 = arith.subf %0, %4 : vector<16x128xf32>
    %6 = math.exp %5 : vector<16x128xf32>
    %cst_3 = arith.constant dense<0.000000e+00> : vector<16xf32>
    %7 = vector.multi_reduction <add>, %6, %cst_3 [1] : vector<16x128xf32> to vector<16xf32>
    %8 = vector.shape_cast %7 : vector<16xf32> to vector<16x1xf32>
    %9 = math.log %8 : vector<16x1xf32>
    %cst_4 = arith.constant dense<0.000000e+00> : vector<16xf32>
    %10 = vector.multi_reduction <add>, %1, %cst_4 [1] : vector<16x128xf32> to vector<16xf32>
    %11 = vector.shape_cast %10 : vector<16xf32> to vector<16x1xf32>
    %12 = arith.mulf %1, %5 : vector<16x128xf32>
    %cst_5 = arith.constant dense<0.000000e+00> : vector<16xf32>
    %13 = vector.multi_reduction <add>, %12, %cst_5 [1] : vector<16x128xf32> to vector<16xf32>
    %14 = vector.shape_cast %13 : vector<16xf32> to vector<16x1xf32>
    %15 = arith.mulf %9, %11 : vector<16x1xf32>
    %16 = arith.subf %15, %14 : vector<16x1xf32>
    %c0_6 = arith.constant 0 : index
    %c0_7 = arith.constant 0 : index
    %17 = vector.load %arg3[%c0_6, %c0_7] : memref<16x1xf32, #tpu.memory_space<vmem>>, vector<16x1xf32>
    tpu.vector_store %arg3[%c0_6, %c0_7], %16 {strides = array<i32>} : memref<16x1xf32, #tpu.memory_space<vmem>>, vector<16x1xf32>,
    return
  }
  func.func @transform_0(%arg0: i32) -> (i32, i32) {
    %c0_i32 = arith.constant 0 : i32
    %c0_i32_0 = arith.constant 0 : i32
    return %arg0, %c0_i32 : i32, i32
  }
  func.func @transform_1(%arg0: i32) -> (i32, i32) {
    %c0_i32 = arith.constant 0 : i32
    %c0_i32_0 = arith.constant 0 : i32
    return %arg0, %c0_i32 : i32, i32
  }
  func.func @transform_2(%arg0: i32) -> (i32, i32) {
    %c0_i32 = arith.constant 0 : i32
    %c0_i32_0 = arith.constant 0 : i32
    return %arg0, %c0_i32 : i32, i32
  }
}

</mosaic_0001>

<llo_original>
// kernel: tpu_custom_call.1
$region0: #{tpu_custom_call.1}
  #allocation0 [shape = 'u32[]', space=smem, size = 0x4, offset = 0x4, fixed_abs, tag = 'smem constant byte address 0x4 - core index']
  #allocation1 [shape = 'u32[144,128]{1,0:T(1,128)}', space=vmem, size = 0x12000, scoped, tag = 'internal scratch']
  %s0 = inlined_call_operand.hbm [shape: f32[16,128], index: 0, kind: input, shape index: {}]
  %s1 = inlined_call_operand.hbm [shape: f32[16,128], index: 1, kind: input, shape index: {}]
  %s2 = inlined_call_operand.vmem [shape: f32[16,1], index: 2, kind: output, shape index: {}]
  %s3 = sld [smem:[#allocation0]]
  $region26: #{tpu_custom_call.1} parent=0
    _
  %s5 = ssub.s32 1, %s3
  %s6 = scalar_select 0, %s5, %s3
  $region1: #{tpu_custom_call.1} parent=0
    #allocation2 [shape = 'u8[8192]{0}', space=vmem, size = 0x2000, scoped, tag = 'input window, operand 0, single buffered']
    #allocation3 [shape = 's32[1]{0}', space=sflag, size = 0x4, scoped, tag = 'scoped memory for tpu_custom_call.1']
    #allocation4 [shape = 'u8[8192]{0}', space=vmem, size = 0x2000, scoped, tag = 'input window, operand 1, single buffered']
    #allocation5 [shape = 's32[1]{0}', space=sflag, size = 0x4, scoped, tag = 'scoped memory for tpu_custom_call.1']
    %7 = vsyncpa [#allocation3], 0
    %8 = vsyncpa [#allocation5], 0
    // Predicated region
    $region2: #{tpu_custom_call.1} parent=1 // pred_check
      _
    $region3: #{tpu_custom_call.1} parent=1 // pred_check_branch
      %10 = sbr.rel (0) target = $region5
    $region4: #{tpu_custom_call.1} parent=1 // pred_region
      %s12 = ssub.s32 256, 256
      %13 = vsyncadd [#allocation3], %s12
      %s14 = sshll.u32 [#allocation2], 4
      %s15 = int_to_ptr.vmem [resolvable:$true] %s14
      %20 = dma.hbm_to_vmem [thread:$0]  %s0, 256, %s15, [#allocation3], 128, 128, 8
    $region5: #{tpu_custom_call.1} parent=1 // pred_fallthru
      _
    // Predicated region
    $region6: #{tpu_custom_call.1} parent=1 // pred_check
      _
    $region7: #{tpu_custom_call.1} parent=1 // pred_check_branch
      %22 = sbr.rel (0) target = $region9
    $region8: #{tpu_custom_call.1} parent=1 // pred_region
      %s24 = ssub.s32 256, 256
      %25 = vsyncadd [#allocation5], %s24
      %s26 = sshll.u32 [#allocation4], 4
      %s27 = int_to_ptr.vmem [resolvable:$true] %s26
      %32 = dma.hbm_to_vmem [thread:$0]  %s1, 256, %s27, [#allocation5], 128, 128, 8
    $region9: #{tpu_custom_call.1} parent=1 // pred_fallthru
      _
    // Predicated region
    $region10: #{tpu_custom_call.1} parent=1 // pred_check
      _
    $region11: #{tpu_custom_call.1} parent=1 // pred_check_branch
      %34 = sbr.rel (0) target = $region13
    $region12: #{tpu_custom_call.1} parent=1 // pred_region
      %35 = dma.done [#allocation3], 256
    $region13: #{tpu_custom_call.1} parent=1 // pred_fallthru
      _
    // Predicated region
    $region14: #{tpu_custom_call.1} parent=1 // pred_check
      _
    $region15: #{tpu_custom_call.1} parent=1 // pred_check_branch
      %37 = sbr.rel (0) target = $region17
    $region16: #{tpu_custom_call.1} parent=1 // pred_region
      %38 = dma.done [#allocation5], 256
    $region17: #{tpu_custom_call.1} parent=1 // pred_fallthru
      _
    %v39 = vld [vmem:[#allocation2] sm:$0xff]
    %v40 = vld [vmem:[#allocation2 + $0x8] sm:$0xff]
    %v41 = vld [vmem:[#allocation4] sm:$0xff]
    %v42 = vld [vmem:[#allocation4 + $0x8] sm:$0xff]
    %43 = vmax.xlane.f32.xlu0 %v39
    %v44 = vpop.xlane.xlu0 %43
    %45 = vmax.xlane.f32.xlu0 %v40
    %v46 = vpop.xlane.xlu0 %45
    %v47 = vsub.f32 %v39, %v44
    %v48 = vsub.f32 %v40, %v46
    %v49 = vmul.f32 %v47, 1.442695
    %v50 = vpow.pop %v49
    %v51 = vmul.f32 %v48, 1.442695
    %v52 = vpow.pop %v51
    %53 = vadd.xlane.f32.xlu0 %v50
    %v54 = vpop.xlane.xlu0 %53
    %55 = vadd.xlane.f32.xlu0 %v52
    %v56 = vpop.xlane.xlu0 %55
    %v57 = vlog2.pop %v54
    %v58 = vmul.f32 %v57, 0.6931472
    %v59 = vlog2.pop %v56
    %v60 = vmul.f32 %v59, 0.6931472
    %61 = vadd.xlane.f32.xlu0 %v41
    %v62 = vpop.xlane.xlu0 %61
    %63 = vadd.xlane.f32.xlu0 %v42
    %v64 = vpop.xlane.xlu0 %63
    %v65 = vmul.f32 %v41, %v47
    %v66 = vmul.f32 %v42, %v48
    %67 = vadd.xlane.f32.xlu0 %v65
    %v68 = vpop.xlane.xlu0 %67
    %69 = vadd.xlane.f32.xlu0 %v66
    %v70 = vpop.xlane.xlu0 %69
    %v71 = vmul.f32 %v58, %v62
    %v72 = vmul.f32 %v60, %v64
    %v73 = vsub.f32 %v71, %v68
    %v74 = vsub.f32 %v72, %v70
    %vm75 = vcmask 7168
    %76 = vst.msk [vmem:[%s2] sm:$0xff] %vm75, %v73
    %77 = vst.msk [vmem:[%s2 + $0x8] sm:$0xff] %vm75, %v74
    // Predicated region
    $region18: #{tpu_custom_call.1} parent=1 // pred_check
      _
    $region19: #{tpu_custom_call.1} parent=1 // pred_check_branch
      %79 = sbr.rel (0) target = $region21
    $region20: #{tpu_custom_call.1} parent=1 // pred_region
      _
    $region21: #{tpu_custom_call.1} parent=1 // pred_fallthru
      _
    // Predicated region
    $region22: #{tpu_custom_call.1} parent=1 // pred_check
      _
    $region23: #{tpu_custom_call.1} parent=1 // pred_check_branch
      %81 = sbr.rel (0) target = $region25
    $region24: #{tpu_custom_call.1} parent=1 // pred_region
      _
    $region25: #{tpu_custom_call.1} parent=1 // pred_fallthru
      _
    %82 = vsyncpa [#allocation3], 1
    %83 = vsyncpa [#allocation5], 1

</llo_original>
